<compile_context>
chip_gen: v7x
topology: tpu7x:2x2x1
jax: 0.10.0
libtpu: 0.0.40
codegen_flags: <defaults>
</compile_context>

<pallas_src>
import functools

import jax
import jax.numpy as jnp
from jax.experimental import pallas as pl
from jax.experimental.pallas import tpu as pltpu

LANE = 128          # lane width (fast / last dim)
MIN_TR = 8          # sublane granularity
TARGET_TR = 2048    # rows per tile for large inputs
NCORES = 2          # outer 'parallel' grid axis (v7x megacore; harmless elsewhere)


def _cdiv(a, b):
    return -(-a // b)


def _csd_kernel(theta_ref, mu_ref, omega_ref, out_ref, acc_ref):
    """Fused omega * (theta - mu)^2 accumulation.

    acc_ref : (TR, 128) f32 VMEM scratch, persists across the inner grid axis.
    out_ref : (1, 1, 1) f32 per-core partial sum, written at the last step.
    """
    i = pl.program_id(1)

    @pl.when(i == 0)
    def _():
        acc_ref[...] = jnp.zeros_like(acc_ref)

    theta = theta_ref[...].astype(jnp.float32)
    mu = mu_ref[...].astype(jnp.float32)
    omega = omega_ref[...].astype(jnp.float32)
    diff = theta - mu
    # Pure VPU elementwise accumulate; co-issues with the next tile's DMA.
    acc_ref[...] += omega * diff * diff

    @pl.when(i == pl.num_programs(1) - 1)
    def _():
        # Single XLU reduce at the very end of this core's stream.
        out_ref[...] = jnp.sum(acc_ref[...]).reshape(1, 1, 1)


def _geometry(n_elems):
    """Pick (row_tile, n_cores, inner_steps) for n_elems flattened elements."""
    rows = max(1, _cdiv(n_elems, LANE))
    if rows <= TARGET_TR:
        tr = max(MIN_TR, _cdiv(rows, MIN_TR) * MIN_TR)
        p, inner = 1, 1
    else:
        tr = TARGET_TR
        p = NCORES
        inner = _cdiv(rows, p * tr)
    return tr, p, inner


@functools.lru_cache(maxsize=None)
def _make_csd_call(tr, p, inner):
    spec = pl.BlockSpec((tr, LANE), lambda pp, i: (pp * inner + i, 0))
    return pl.pallas_call(
        _csd_kernel,
        out_shape=jax.ShapeDtypeStruct((p, 1, 1), jnp.float32),
        grid=(p, inner),
        in_specs=[spec, spec, spec],
        out_specs=pl.BlockSpec((1, 1, 1), lambda pp, i: (pp, 0, 0)),
        scratch_shapes=[pltpu.VMEM((tr, LANE), jnp.float32)],
        compiler_params=pltpu.CompilerParams(
            dimension_semantics=("parallel", "arbitrary")),
    )


def _concat_flat(tensors):
    flats = [jnp.ravel(t) for t in tensors]
    return flats[0] if len(flats) == 1 else jnp.concatenate(flats)


def _pad_to_rows(flat, total_rows):
    pad = total_rows * LANE - flat.shape[0]
    if pad:
        flat = jnp.pad(flat, (0, pad))  # zeros -> omega padding contributes 0
    return flat.reshape(total_rows, LANE)


def csd_weighted_sq_sum(theta_flat, mu_flat, omega_flat):
    """sum(omega * (theta - mu)**2) over flat 1-D arrays, computed on-chip."""
    n = theta_flat.shape[0]
    tr, p, inner = _geometry(n)
    total_rows = p * inner * tr
    call = _make_csd_call(tr, p, inner)
    partials = call(_pad_to_rows(theta_flat, total_rows),
                    _pad_to_rows(mu_flat, total_rows),
                    _pad_to_rows(omega_flat, total_rows))
    return jnp.sum(partials)


class CSDLossPallas:
    """JAX/Pallas equivalent of the PyTorch CSDLoss module.

    `param_filter` maps model_params -> dict of trainable params (by name).
    `model_named_params` plays the role of ctx.model.named_parameters().
    Packed mu/omega and the compiled kernel are cached per (selected, mu, omega).
    """

    def __init__(self, param_filter, model_named_params):
        self._param_filter = param_filter
        self._model_named_params = model_named_params
        self._cache = {}

    def forward(self, model_params, mu, omega, round_num):
        trainable = self._param_filter(model_params)
        selected = []
        for name in trainable:
            if 'norm' in name:
                continue
            if name in omega:
                if name not in self._model_named_params:
                    print('theta is None')
                    continue
                selected.append(name)
        if not selected:
            return None  # matches PyTorch: loss stays None if nothing selected

        cache_key = (tuple(selected), id(mu), id(omega))
        entry = self._cache.get(cache_key)
        if entry is None:
            mu_flat = _concat_flat([mu[nm] for nm in selected])
            omega_flat = _concat_flat([omega[nm] for nm in selected])
            n = mu_flat.shape[0]
            tr, p, inner = _geometry(n)
            total_rows = p * inner * tr
            entry = dict(
                total_rows=total_rows,
                mu2d=_pad_to_rows(mu_flat, total_rows),
                omega2d=_pad_to_rows(omega_flat, total_rows),
                call=_make_csd_call(tr, p, inner),
                _keepalive=(mu, omega),  # pin dict identities for the id() key
            )
            self._cache[cache_key] = entry

        # TODO(synk): theta still needs a per-call concat+pad pass; reading the
        # separately-allocated parameter tensors in place is not expressible in
        # a single pallas_call without a fused contiguous parameter buffer.
        theta_flat = _concat_flat(
            [self._model_named_params[nm] for nm in selected])
        theta2d = _pad_to_rows(theta_flat, entry["total_rows"])

        partials = entry["call"](theta2d, entry["mu2d"], entry["omega2d"])
        return jnp.sum(partials) * (0.5 / round_num)

    __call__ = forward


def _reference_loss(selected, model_named_params, mu, omega, round_num):
    loss = jnp.float32(0.0)
    for name in selected:
        th = model_named_params[name].astype(jnp.float32)
        loss = loss + 0.5 / round_num * jnp.sum(
            omega[name].astype(jnp.float32) *
            (th - mu[name].astype(jnp.float32)) ** 2)
    return loss


if __name__ == "__main__":
    key = jax.random.PRNGKey(0)

    # Small synthetic "model" parameters (conv weights, fc weights, a norm layer
    # that gets skipped, and a head not covered by omega).
    param_shapes = {
        "conv1.weight": (4, 4, 3, 3),
        "conv1.bias": (4,),
        "norm1.weight": (4,),          # skipped: 'norm' in name
        "fc.weight": (8, 64),
        "fc.bias": (8,),
        "head.weight": (2, 8),          # not in omega -> skipped
    }

    keys = jax.random.split(key, 3 * len(param_shapes))
    model_named_params, mu, omega = {}, {}, {}
    for idx, (name, shp) in enumerate(param_shapes.items()):
        k_t, k_m, k_o = keys[3 * idx], keys[3 * idx + 1], keys[3 * idx + 2]
        model_named_params[name] = jax.random.normal(k_t, shp, jnp.float32)
        if name != "head.weight":  # omega only covers a subset of params
            mu[name] = jax.random.normal(k_m, shp, jnp.float32)
            omega[name] = jnp.abs(jax.random.normal(k_o, shp, jnp.float32))

    def param_filter(model_params):
        return model_params  # identity filter over the incoming dict

    model_params = dict(model_named_params)
    round_num = 3

    csd = CSDLossPallas(param_filter, model_named_params)
    loss = jax.block_until_ready(csd(model_params, mu, omega, round_num))

    selected = [n for n in param_filter(model_params)
                if 'norm' not in n and n in omega]
    ref = _reference_loss(selected, model_named_params, mu, omega, round_num)
    assert jnp.allclose(loss, ref, rtol=1e-5, atol=1e-5), (loss, ref)

    # Second call hits the cache (packed mu/omega + compiled kernel reused).
    loss2 = jax.block_until_ready(csd(model_params, mu, omega, round_num))
    assert jnp.allclose(loss2, ref, rtol=1e-5, atol=1e-5), (loss2, ref)

    # Exercise the large multi-step, megacore-sharded path: 4097 rows of 128
    # -> geometry (tr=2048, p=2, inner=2), grid = (2, 2).
    n_big = 524_325
    kb = jax.random.split(jax.random.PRNGKey(1), 3)
    th_b = jax.random.normal(kb[0], (n_big,), jnp.float32)
    mu_b = jax.random.normal(kb[1], (n_big,), jnp.float32)
    om_b = jnp.abs(jax.random.normal(kb[2], (n_big,), jnp.float32))
    got_b = jax.block_until_ready(csd_weighted_sq_sum(th_b, mu_b, om_b))
    ref_b = jnp.sum(om_b * (th_b - mu_b) ** 2)
    assert jnp.allclose(got_b, ref_b, rtol=1e-4, atol=1e-2), (got_b, ref_b)

    print("KERNEL_OK")
</pallas_src>

<mosaic_0001>
module attributes {stable_mosaic.version = 11 : i64} {
  func.func @_csd_kernel(%arg0: i32, %arg1: i32, %arg2: memref<8x128xf32, #tpu.memory_space<vmem>>, %arg3: memref<8x128xf32, #tpu.memory_space<vmem>>, %arg4: memref<8x128xf32, #tpu.memory_space<vmem>>, %arg5: memref<1x1x1xf32, #tpu.memory_space<vmem>>, %arg6: memref<8x128xf32, #tpu.memory_space<vmem>>) attributes {dimension_semantics = [#tpu.dimension_semantics<parallel>, #tpu.dimension_semantics<arbitrary>], iteration_bounds = array<i64: 1, 1>, scalar_prefetch = 0 : i64, scratch_operands = 1 : i64, tpu.core_type = #tpu.core_type<tc>, window_params = [{transform_indices = @transform_0, window_bounds = array<i64: 8, 128>}, {transform_indices = @transform_1, window_bounds = array<i64: 8, 128>}, {transform_indices = @transform_2, window_bounds = array<i64: 8, 128>}, {transform_indices = @transform_3, window_bounds = array<i64: 1, 1, 1>}]} {
    %c0_i32 = arith.constant 0 : i32
    %0 = arith.cmpi eq, %arg1, %c0_i32 : i32
    %1 = arith.extui %0 : i1 to i32
    %c0_i32_0 = arith.constant 0 : i32
    %2 = arith.cmpi ne, %1, %c0_i32_0 : i32
    scf.if %2 {
      %cst = arith.constant 0.000000e+00 : f32
      %15 = vector.broadcast %cst : f32 to vector<8x128xf32>
      %c0_12 = arith.constant 0 : index
      %c0_13 = arith.constant 0 : index
      %16 = vector.load %arg6[%c0_12, %c0_13] : memref<8x128xf32, #tpu.memory_space<vmem>>, vector<8x128xf32>
      tpu.vector_store %arg6[%c0_12, %c0_13], %15 {strides = array<i32>} : memref<8x128xf32, #tpu.memory_space<vmem>>, vector<8x128xf32>,
    } else {
    }
    %c0 = arith.constant 0 : index
    %c0_1 = arith.constant 0 : index
    %3 = vector.load %arg2[%c0, %c0_1] : memref<8x128xf32, #tpu.memory_space<vmem>>, vector<8x128xf32>
    %c0_2 = arith.constant 0 : index
    %c0_3 = arith.constant 0 : index
    %4 = vector.load %arg3[%c0_2, %c0_3] : memref<8x128xf32, #tpu.memory_space<vmem>>, vector<8x128xf32>
    %c0_4 = arith.constant 0 : index
    %c0_5 = arith.constant 0 : index
    %5 = vector.load %arg4[%c0_4, %c0_5] : memref<8x128xf32, #tpu.memory_space<vmem>>, vector<8x128xf32>
    %6 = arith.subf %3, %4 : vector<8x128xf32>
    %c0_6 = arith.constant 0 : index
    %c0_7 = arith.constant 0 : index
    %7 = vector.load %arg6[%c0_6, %c0_7] : memref<8x128xf32, #tpu.memory_space<vmem>>, vector<8x128xf32>
    %8 = arith.mulf %5, %6 : vector<8x128xf32>
    %9 = arith.mulf %8, %6 : vector<8x128xf32>
    %10 = arith.addf %7, %9 : vector<8x128xf32>
    %c0_8 = arith.constant 0 : index
    %c0_9 = arith.constant 0 : index
    %11 = vector.load %arg6[%c0_8, %c0_9] : memref<8x128xf32, #tpu.memory_space<vmem>>, vector<8x128xf32>
    tpu.vector_store %arg6[%c0_8, %c0_9], %10 {strides = array<i32>} : memref<8x128xf32, #tpu.memory_space<vmem>>, vector<8x128xf32>,
    %c0_i32_10 = arith.constant 0 : i32
    %12 = arith.cmpi eq, %arg1, %c0_i32_10 : i32
    %13 = arith.extui %12 : i1 to i32
    %c0_i32_11 = arith.constant 0 : i32
    %14 = arith.cmpi ne, %13, %c0_i32_11 : i32
    scf.if %14 {
      %c0_12 = arith.constant 0 : index
      %c0_13 = arith.constant 0 : index
      %15 = vector.load %arg6[%c0_12, %c0_13] : memref<8x128xf32, #tpu.memory_space<vmem>>, vector<8x128xf32>
      %16 = vector.shape_cast %15 : vector<8x128xf32> to vector<1x8x128xf32>
      %cst = arith.constant dense<0.000000e+00> : vector<1xf32>
      %17 = vector.multi_reduction <add>, %16, %cst [1, 2] : vector<1x8x128xf32> to vector<1xf32>
      %18 = vector.shape_cast %17 : vector<1xf32> to vector<1x1x1xf32>
      %19 = vector.extract %18[0, 0, 0] : f32 from vector<1x1x1xf32>
      %20 = vector.broadcast %19 : f32 to vector<1x1x1xf32>
      %c0_14 = arith.constant 0 : index
      %c0_15 = arith.constant 0 : index
      %c0_16 = arith.constant 0 : index
      %21 = vector.load %arg5[%c0_14, %c0_15, %c0_16] : memref<1x1x1xf32, #tpu.memory_space<vmem>>, vector<1x1x1xf32>
      tpu.vector_store %arg5[%c0_14, %c0_15, %c0_16], %20 {strides = array<i32>} : memref<1x1x1xf32, #tpu.memory_space<vmem>>, vector<1x1x1xf32>,
    } else {
    }
    return
  }
  func.func @transform_0(%arg0: i32, %arg1: i32) -> (i32, i32) {
    %c1_i32 = arith.constant 1 : i32
    %0 = arith.muli %arg0, %c1_i32 : i32
    %1 = arith.addi %0, %arg1 : i32
    %c0_i32 = arith.constant 0 : i32
    %c0_i32_0 = arith.constant 0 : i32
    return %1, %c0_i32 : i32, i32
  }
  func.func @transform_1(%arg0: i32, %arg1: i32) -> (i32, i32) {
    %c1_i32 = arith.constant 1 : i32
    %0 = arith.muli %arg0, %c1_i32 : i32
    %1 = arith.addi %0, %arg1 : i32
    %c0_i32 = arith.constant 0 : i32
    %c0_i32_0 = arith.constant 0 : i32
    return %1, %c0_i32 : i32, i32
  }
  func.func @transform_2(%arg0: i32, %arg1: i32) -> (i32, i32) {
    %c1_i32 = arith.constant 1 : i32
    %0 = arith.muli %arg0, %c1_i32 : i32
    %1 = arith.addi %0, %arg1 : i32
    %c0_i32 = arith.constant 0 : i32
    %c0_i32_0 = arith.constant 0 : i32
    return %1, %c0_i32 : i32, i32
  }
  func.func @transform_3(%arg0: i32, %arg1: i32) -> (i32, i32, i32) {
    %c0_i32 = arith.constant 0 : i32
    %c0_i32_0 = arith.constant 0 : i32
    %c0_i32_1 = arith.constant 0 : i32
    return %arg0, %c0_i32, %c0_i32_0 : i32, i32, i32
  }
}

</mosaic_0001>

<llo_original>
// kernel: tpu_custom_call.1
$region0: #{tpu_custom_call.1}
  #allocation0 [shape = 'u32[]', space=smem, size = 0x4, offset = 0x4, fixed_abs, tag = 'smem constant byte address 0x4 - core index']
  #allocation1 [shape = 'u32[144,128]{1,0:T(1,128)}', space=vmem, size = 0x12000, scoped, tag = 'internal scratch']
  #allocation2 [shape = 'f32[8,128]{1,0:T(8,128)}', space=vmem, size = 0x1000, scoped, tag = 'scratch operand']
  %s0 = inlined_call_operand.hbm [shape: f32[8,128], index: 0, kind: input, shape index: {}]
  %s1 = inlined_call_operand.hbm [shape: f32[8,128], index: 1, kind: input, shape index: {}]
  %s2 = inlined_call_operand.hbm [shape: f32[8,128], index: 2, kind: input, shape index: {}]
  %s3 = inlined_call_operand.hbm [shape: f32[1,1,1], index: 3, kind: output, shape index: {}]
  %s4 = sld [smem:[#allocation0]]
  $region42: #{tpu_custom_call.1} parent=0
    _
  %s6 = ssub.s32 1, %s4
  %s7 = scalar_select 0, %s6, %s4
  $region1: #{tpu_custom_call.1} parent=0
    #allocation3 [shape = 'u8[4096]{0}', space=vmem, size = 0x1000, scoped, tag = 'input window, operand 0, single buffered']
    #allocation4 [shape = 's32[1]{0}', space=sflag, size = 0x4, scoped, tag = 'scoped memory for tpu_custom_call.1']
    #allocation5 [shape = 's32[1]{0}', space=sflag, size = 0x4, scoped, tag = 'scoped memory for tpu_custom_call.1']
    #allocation6 [shape = 'u8[4096]{0}', space=vmem, size = 0x1000, scoped, tag = 'input window, operand 1, single buffered']
    #allocation7 [shape = 's32[1]{0}', space=sflag, size = 0x4, scoped, tag = 'scoped memory for tpu_custom_call.1']
    #allocation8 [shape = 'u8[4096]{0}', space=vmem, size = 0x1000, scoped, tag = 'input window, operand 2, single buffered']
    #allocation9 [shape = 'u8[512]{0}', space=vmem, size = 0x400, scoped, tag = 'output window, operand 0, single buffered']
    %8 = vsyncpa [#allocation4], 0
    %9 = vsyncpa [#allocation7], 0
    %10 = vsyncpa [#allocation5], 0
    // Predicated region
    $region2: #{tpu_custom_call.1} parent=1 // pred_check
      _
    $region3: #{tpu_custom_call.1} parent=1 // pred_check_branch
      %12 = sbr.rel (0) target = $region5
    $region4: #{tpu_custom_call.1} parent=1 // pred_region
      %s13 = sadd.s32 0, 0
      %s15 = ssub.s32 128, 128
      %16 = vsyncadd [#allocation4], %s15
      %s17 = smul.addr %s13, 128
      %s18 = scalar_lea.hbm %s0, %s17
      %s20 = sshll.u32 [#allocation3], 4
      %s21 = int_to_ptr.vmem [resolvable:$true] %s20
      %23 = dma.hbm_to_vmem [thread:$0]  %s18, 128, %s21, [#allocation4]
    $region5: #{tpu_custom_call.1} parent=1 // pred_fallthru
      _
    // Predicated region
    $region6: #{tpu_custom_call.1} parent=1 // pred_check
      _
    $region7: #{tpu_custom_call.1} parent=1 // pred_check_branch
      %25 = sbr.rel (0) target = $region9
    $region8: #{tpu_custom_call.1} parent=1 // pred_region
      %s26 = sadd.s32 0, 0
      %s28 = ssub.s32 128, 128
      %29 = vsyncadd [#allocation7], %s28
      %s30 = smul.addr %s26, 128
      %s31 = scalar_lea.hbm %s1, %s30
      %s33 = sshll.u32 [#allocation6], 4
      %s34 = int_to_ptr.vmem [resolvable:$true] %s33
      %36 = dma.hbm_to_vmem [thread:$0]  %s31, 128, %s34, [#allocation7]
    $region9: #{tpu_custom_call.1} parent=1 // pred_fallthru
      _
    // Predicated region
    $region10: #{tpu_custom_call.1} parent=1 // pred_check
      _
    $region11: #{tpu_custom_call.1} parent=1 // pred_check_branch
      %38 = sbr.rel (0) target = $region13
    $region12: #{tpu_custom_call.1} parent=1 // pred_region
      %s39 = sadd.s32 0, 0
      %s41 = ssub.s32 128, 128
      %42 = vsyncadd [#allocation7], %s41
      %s43 = smul.addr %s39, 128
      %s44 = scalar_lea.hbm %s2, %s43
      %s46 = sshll.u32 [#allocation8], 4
      %s47 = int_to_ptr.vmem [resolvable:$true] %s46
      %49 = dma.hbm_to_vmem [thread:$0]  %s44, 128, %s47, [#allocation7]
    $region13: #{tpu_custom_call.1} parent=1 // pred_fallthru
      _
    // Predicated region
    $region14: #{tpu_custom_call.1} parent=1 // pred_check
      _
    $region15: #{tpu_custom_call.1} parent=1 // pred_check_branch
      %51 = sbr.rel (0) target = $region17
    $region16: #{tpu_custom_call.1} parent=1 // pred_region
      %52 = dma.done [#allocation4], 128
    $region17: #{tpu_custom_call.1} parent=1 // pred_fallthru
      _
    // Predicated region
    $region18: #{tpu_custom_call.1} parent=1 // pred_check
      _
    $region19: #{tpu_custom_call.1} parent=1 // pred_check_branch
      %54 = sbr.rel (0) target = $region21
    $region20: #{tpu_custom_call.1} parent=1 // pred_region
      %55 = dma.done [#allocation7], 128
    $region21: #{tpu_custom_call.1} parent=1 // pred_fallthru
      _
    // Predicated region
    $region22: #{tpu_custom_call.1} parent=1 // pred_check
      _
    $region23: #{tpu_custom_call.1} parent=1 // pred_check_branch
      %57 = sbr.rel (0) target = $region25
    $region24: #{tpu_custom_call.1} parent=1 // pred_region
      %58 = dma.done [#allocation7], 128
    $region25: #{tpu_custom_call.1} parent=1 // pred_fallthru
      _
    %s59 = sadd.s32 0, 0
    %s60 = sadd.s32 0, 0
    %s61 = sadd.s32 0, 0
    %p62 = scmp.eq.s32.totalorder 0, 0
    // Predicated region
    $region26: #{tpu_custom_call.1} parent=1 // pred_check
      %p63 = pneg %p62
    $region27: #{tpu_custom_call.1} parent=1 // pred_check_branch
      %65 = sbr.rel (%p63) target = $region29
    $region28: #{tpu_custom_call.1} parent=1 // pred_region
      %66 = vst [vmem:[#allocation2] sm:$0xff] 0.0
    $region29: #{tpu_custom_call.1} parent=1 // pred_fallthru
      _
    %v67 = vld [vmem:[#allocation3] sm:$0xff]
    %v68 = vld [vmem:[#allocation6] sm:$0xff]
    %v69 = vld [vmem:[#allocation8] sm:$0xff]
    %v70 = vsub.f32 %v67, %v68
    %v71 = vld [vmem:[#allocation2] sm:$0xff]
    %v72 = vmul.f32 %v69, %v70
    %v73 = vmul.f32 %v72, %v70
    %v74 = vadd.f32 %v71, %v73
    %75 = vst [vmem:[#allocation2] sm:$0xff] %v74
    // Predicated region
    $region30: #{tpu_custom_call.1} parent=1 // pred_check
      %p76 = pneg %p62
    $region31: #{tpu_custom_call.1} parent=1 // pred_check_branch
      %78 = sbr.rel (%p76) target = $region33
    $region32: #{tpu_custom_call.1} parent=1 // pred_region
      %v79 = vld [vmem:[#allocation2] sm:$0xff]
      %80 = vadd.xlane.f32.xlu0 %v79
      %v81 = vpop.xlane.xlu0 %80
      %v82 = vrot.slane %v81, 4
      %v83 = vadd.f32 %v81, %v82
      %v84 = vrot.slane %v83, 2
      %v85 = vadd.f32 %v83, %v84
      %v86 = vrot.slane %v85, 1
      %v87 = vadd.f32 %v85, %v86
      %s88 = vtos %v87
      %v89 = vstv %s88
      %vm90 = vcmask 0
      %91 = vst.msk [vmem:[#allocation9] sm:$0x1] %vm90, %v89
    $region33: #{tpu_custom_call.1} parent=1 // pred_fallthru
      _
    // Predicated region
    $region34: #{tpu_custom_call.1} parent=1 // pred_check
      _
    $region35: #{tpu_custom_call.1} parent=1 // pred_check_branch
      %93 = sbr.rel (0) target = $region37
    $region36: #{tpu_custom_call.1} parent=1 // pred_region
      %s95 = ssub.s32 16, 16
      %96 = vsyncadd [#allocation5], %s95
      %s98 = sshll.u32 [#allocation9], 4
      %s99 = int_to_ptr.vmem [resolvable:$true] %s98
      %101 = dma.vmem_to_hbm [thread:$0]  %s99, 16, %s3, [#allocation5]
    $region37: #{tpu_custom_call.1} parent=1 // pred_fallthru
      _
    // Predicated region
    $region38: #{tpu_custom_call.1} parent=1 // pred_check
      _
    $region39: #{tpu_custom_call.1} parent=1 // pred_check_branch
      %103 = sbr.rel (0) target = $region41
    $region40: #{tpu_custom_call.1} parent=1 // pred_region
      %104 = dma.done [#allocation5], 16
    $region41: #{tpu_custom_call.1} parent=1 // pred_fallthru
      _
    %105 = vsyncpa [#allocation4], 1
    %106 = vsyncpa [#allocation7], 1
    %107 = vsyncpa [#allocation5], 1

</llo_original>
